<compile_context>
chip_gen: v7x
topology: tpu7x:2x2x1
jax: 0.10.0
libtpu: 0.0.40
codegen_flags: <defaults>
</compile_context>

<pallas_src>
import functools

import jax
import jax.numpy as jnp
from jax.experimental import pallas as pl
from jax.experimental.pallas import tpu as pltpu

_LANE = 128
_SUBLANE_F32 = 8
_SUBLANE_BF16 = 16
# Conservative fallback if the hardware query fails: assume the most
# VMEM-constrained generation (v7x: 64 MiB per TensorCore).
_DEFAULT_VMEM_CAPACITY = 64 * 1024 * 1024


def _round_up(x, m):
    return (x + m - 1) // m * m


def _tpu_generation_info():
    """Returns (vmem_capacity_bytes, num_tensorcores) with safe fallbacks."""
    vmem = _DEFAULT_VMEM_CAPACITY
    num_tc = 1
    try:
        vmem = int(pltpu.get_tpu_info().vmem_capacity_bytes)
    except Exception:
        pass
    try:
        kind = jax.devices()[0].device_kind.lower()
        if "v7" in kind:
            num_tc = 2  # v7x: 2 TensorCores/chip; "parallel" axis shards them.
    except Exception:
        pass
    return vmem, num_tc


def _mlp_kernel(x_ref, w1_ref, b1_ref, w2_ref, b2_ref, w3_ref, b3_ref, o_ref):
    # Three chained MXU matmuls with f32 accumulation. The intermediate casts
    # are only emitted on the bf16 path (dtypes are static at trace time), so
    # the f32 path has no redundant VPU converts.
    x = x_ref[...]
    h1 = jnp.dot(x, w1_ref[...], preferred_element_type=jnp.float32) + b1_ref[...]
    if h1.dtype != w2_ref.dtype:
        h1 = h1.astype(w2_ref.dtype)
    h2 = jnp.dot(h1, w2_ref[...], preferred_element_type=jnp.float32) + b2_ref[...]
    if h2.dtype != w3_ref.dtype:
        h2 = h2.astype(w3_ref.dtype)
    out = jnp.dot(h2, w3_ref[...], preferred_element_type=jnp.float32) + b3_ref[...]
    o_ref[...] = out.astype(o_ref.dtype)


def _choose_block_b(B, budget_bytes, weight_resident, per_row_bytes, num_tc,
                    row_mult):
    """Pick the batch tile height (multiple of row_mult, VMEM-budgeted)."""
    cap = (budget_bytes - weight_resident) // max(per_row_bytes, 1)
    cap = max(row_mult, (cap // row_mult) * row_mult)
    if B <= row_mult:
        return B  # tiny batch: one tile; block == full dim is legal.
    b_full = _round_up(B, row_mult)
    if num_tc <= 1:
        # v5e / v6e: the grid is a sequential loop on one TensorCore, so the
        # largest tile that fits maximizes MXU M-fill (per-step overhead
        # ~0.35us favours one big tile).
        return int(min(b_full, cap))
    # v7x: aim for >= 2 grid steps per TensorCore so x/out DMAs can be hidden
    # under compute, but keep tiles >= 256 rows when the batch allows it.
    tile = _round_up(pl.cdiv(B, 2 * num_tc), row_mult)
    tile = max(tile, min(256, b_full))
    return int(min(tile, cap, b_full))


def mlp_forward(x, params, *, block_b=None, use_bf16=False,
                single_buffer_weights=True):
    """x: (B, in_dim). params use PyTorch conventions (w: (out, in), b: (out,)).
    Returns (B, 10). use_bf16 is opt-in (bf16 weights/activations, f32 MXU
    accumulation) since it changes numerics vs the f32 reference."""
    B, in_dim = x.shape
    h1 = params["w1"].shape[0]
    h2 = params["w2"].shape[0]
    out_dim = params["w3"].shape[0]  # the PyTorch module hard-codes 10.

    act_dtype = jnp.bfloat16 if use_bf16 else x.dtype
    act_bytes = jnp.dtype(act_dtype).itemsize
    out_bytes = jnp.dtype(x.dtype).itemsize
    row_mult = _SUBLANE_BF16 if use_bf16 else _SUBLANE_F32

    # Zero-pad every feature dim to a lane multiple (numerically exact).
    in_p = _round_up(in_dim, _LANE)
    h1_p = _round_up(h1, _LANE)
    h2_p = _round_up(h2, _LANE)
    out_p = _round_up(out_dim, _LANE)

    def _pad2(a, rows, cols):
        return jnp.pad(a, ((0, rows - a.shape[0]), (0, cols - a.shape[1])))

    # --- weight prep (glue, outside the kernel): transpose to (in, out) ---
    w1 = _pad2(params["w1"].T.astype(act_dtype), in_p, h1_p)
    w2 = _pad2(params["w2"].T.astype(act_dtype), h1_p, h2_p)
    w3 = _pad2(params["w3"].T.astype(act_dtype), h2_p, out_p)
    b1 = _pad2(params["b1"][None, :].astype(jnp.float32), 1, h1_p)
    b2 = _pad2(params["b2"][None, :].astype(jnp.float32), 1, h2_p)
    b3 = _pad2(params["b3"][None, :].astype(jnp.float32), 1, out_p)

    # --- generation-aware VMEM geometry ---
    vmem_capacity, num_tc = _tpu_generation_info()
    budget = int(0.7 * vmem_capacity)
    w_bufs = 1 if single_buffer_weights else 2
    weight_resident = w_bufs * (
        act_bytes * (in_p * h1_p + h1_p * h2_p + h2_p * out_p)
        + 4 * (h1_p + h2_p + out_p))
    per_row = (2 * act_bytes * in_p        # double-buffered x tile
               + 2 * out_bytes * out_p     # double-buffered out tile
               + 4 * (h1_p + h2_p))        # f32 intermediates

    if block_b is None:
        block_b = _choose_block_b(B, budget, weight_resident, per_row, num_tc,
                                  row_mult)
    if block_b != B and block_b % row_mult != 0:
        raise ValueError(
            f"block_b={block_b} must be a multiple of {row_mult} for "
            f"{jnp.dtype(act_dtype).name} unless it equals the full batch {B}.")

    B_pad = _round_up(B, block_b)
    x_in = jnp.pad(x.astype(act_dtype), ((0, B_pad - B), (0, in_p - in_dim)))
    grid = (B_pad // block_b,)

    # VMEM limit sized from the actual footprint, capped by this generation's
    # physical capacity (raises v5e's 16 MiB scoped default when needed).
    need = weight_resident + block_b * per_row + (2 << 20)
    vmem_limit = int(min(int(0.9 * vmem_capacity),
                         max(need * 5 // 4, 32 << 20)))

    flops = 2 * B_pad * (in_p * h1_p + h1_p * h2_p + h2_p * out_p)
    bytes_accessed = (act_bytes * (B_pad * in_p + in_p * h1_p + h1_p * h2_p
                                   + h2_p * out_p)
                      + 4 * (h1_p + h2_p + out_p)
                      + out_bytes * B_pad * out_p)

    def _weight_spec(shape):
        # Constant index_map -> the block never changes across the grid; a
        # single pipeline buffer suffices (halves resident weight VMEM).
        if single_buffer_weights:
            return pl.BlockSpec(shape, lambda i: (0, 0),
                                pipeline_mode=pl.Buffered(1))
        return pl.BlockSpec(shape, lambda i: (0, 0))

    out_padded = pl.pallas_call(
        _mlp_kernel,
        out_shape=jax.ShapeDtypeStruct((B_pad, out_p), x.dtype),
        grid_spec=pltpu.PrefetchScalarGridSpec(
            num_scalar_prefetch=0,
            grid=grid,
            in_specs=[
                pl.BlockSpec((block_b, in_p), lambda i: (i, 0)),
                _weight_spec((in_p, h1_p)),
                _weight_spec((1, h1_p)),
                _weight_spec((h1_p, h2_p)),
                _weight_spec((1, h2_p)),
                _weight_spec((h2_p, out_p)),
                _weight_spec((1, out_p)),
            ],
            out_specs=pl.BlockSpec((block_b, out_p), lambda i: (i, 0)),
        ),
        compiler_params=pltpu.CompilerParams(
            dimension_semantics=("parallel",),
            vmem_limit_bytes=vmem_limit,
        ),
        cost_estimate=pl.CostEstimate(
            flops=flops, transcendentals=0, bytes_accessed=bytes_accessed),
    )(x_in, w1, b1, w2, b2, w3, b3)

    # Slice off batch padding and the lane padding of the final layer.
    return out_padded[:B, :out_dim]


def init_params(key, in_dim, n_hidden_1, n_hidden_2):
    # Deterministic init mimicking nn.Linear's uniform(-1/sqrt(fan_in), ...).
    ks = jax.random.split(key, 6)

    def lin(kw, kb, fan_in, fan_out):
        bound = 1.0 / jnp.sqrt(fan_in)
        w = jax.random.uniform(kw, (fan_out, fan_in), jnp.float32, -bound, bound)
        b = jax.random.uniform(kb, (fan_out,), jnp.float32, -bound, bound)
        return w, b

    w1, b1 = lin(ks[0], ks[1], in_dim, n_hidden_1)
    w2, b2 = lin(ks[2], ks[3], n_hidden_1, n_hidden_2)
    # layer3 always maps n_hidden_2 -> 10 (the PyTorch module ignores out_dim).
    w3, b3 = lin(ks[4], ks[5], n_hidden_2, 10)
    return {"w1": w1, "b1": b1, "w2": w2, "b2": b2, "w3": w3, "b3": b3}


def reference_forward(x, p):
    h1 = x @ p["w1"].T + p["b1"]
    h2 = h1 @ p["w2"].T + p["b2"]
    return h2 @ p["w3"].T + p["b3"]


if __name__ == "__main__":
    key = jax.random.PRNGKey(0)
    k_x, k_p = jax.random.split(key)

    B, in_dim, n_hidden_1, n_hidden_2 = 8, 32, 64, 64
    x = jax.random.normal(k_x, (B, in_dim), jnp.float32)
    params = init_params(k_p, in_dim, n_hidden_1, n_hidden_2)

    try:
        out = jax.block_until_ready(jax.jit(mlp_forward)(x, params))
    except Exception:
        # Fallback for jax versions that reject a 1-deep pipeline_mode on a
        # BlockSpec: retry with default (double-buffered) weight specs.
        out = jax.block_until_ready(
            jax.jit(functools.partial(mlp_forward, single_buffer_weights=False))(
                x, params))

    ref = reference_forward(x, params)
    assert out.shape == (B, 10), out.shape
    assert jnp.allclose(out, ref, atol=1e-4, rtol=1e-4), "mismatch vs reference"
    print("KERNEL_OK")
</pallas_src>

<mosaic_0001>
module attributes {stable_mosaic.version = 11 : i64} {
  func.func @_mlp_kernel(%arg0: i32, %arg1: memref<8x128xf32, #tpu.memory_space<vmem>>, %arg2: memref<128x128xf32, #tpu.memory_space<vmem>>, %arg3: memref<1x128xf32, #tpu.memory_space<vmem>>, %arg4: memref<128x128xf32, #tpu.memory_space<vmem>>, %arg5: memref<1x128xf32, #tpu.memory_space<vmem>>, %arg6: memref<128x128xf32, #tpu.memory_space<vmem>>, %arg7: memref<1x128xf32, #tpu.memory_space<vmem>>, %arg8: memref<8x128xf32, #tpu.memory_space<vmem>>) attributes {dimension_semantics = [#tpu.dimension_semantics<parallel>], iteration_bounds = array<i64: 1>, scalar_prefetch = 0 : i64, scratch_operands = 0 : i64, tpu.core_type = #tpu.core_type<tc>, window_params = [{transform_indices = @transform_0, window_bounds = array<i64: 8, 128>}, {pipeline_mode = #tpu.pipeline_mode<synchronous>, transform_indices = @transform_1, window_bounds = array<i64: 128, 128>}, {pipeline_mode = #tpu.pipeline_mode<synchronous>, transform_indices = @transform_2, window_bounds = array<i64: 1, 128>}, {pipeline_mode = #tpu.pipeline_mode<synchronous>, transform_indices = @transform_3, window_bounds = array<i64: 128, 128>}, {pipeline_mode = #tpu.pipeline_mode<synchronous>, transform_indices = @transform_4, window_bounds = array<i64: 1, 128>}, {pipeline_mode = #tpu.pipeline_mode<synchronous>, transform_indices = @transform_5, window_bounds = array<i64: 128, 128>}, {pipeline_mode = #tpu.pipeline_mode<synchronous>, transform_indices = @transform_6, window_bounds = array<i64: 1, 128>}, {transform_indices = @transform_7, window_bounds = array<i64: 8, 128>}]} {
    %c0 = arith.constant 0 : index
    %c0_0 = arith.constant 0 : index
    %0 = vector.load %arg1[%c0, %c0_0] : memref<8x128xf32, #tpu.memory_space<vmem>>, vector<8x128xf32>
    %c0_1 = arith.constant 0 : index
    %c0_2 = arith.constant 0 : index
    %1 = vector.load %arg2[%c0_1, %c0_2] : memref<128x128xf32, #tpu.memory_space<vmem>>, vector<128x128xf32>
    %cst = arith.constant dense<0.000000e+00> : vector<8x128xf32>
    %2 = tpu.matmul %0, %1, %cst {dimension_numbers = #tpu.dot_dimension_numbers<[1], [0], [0], [1], [0, 0, 1, 1], [], []>} : vector<8x128xf32>, vector<128x128xf32>, vector<8x128xf32> -> vector<8x128xf32>
    %c0_3 = arith.constant 0 : index
    %c0_4 = arith.constant 0 : index
    %3 = vector.load %arg3[%c0_3, %c0_4] : memref<1x128xf32, #tpu.memory_space<vmem>>, vector<1x128xf32>
    %4 = vector.broadcast %3 : vector<1x128xf32> to vector<8x128xf32>
    %5 = arith.addf %2, %4 : vector<8x128xf32>
    %c0_5 = arith.constant 0 : index
    %c0_6 = arith.constant 0 : index
    %6 = vector.load %arg4[%c0_5, %c0_6] : memref<128x128xf32, #tpu.memory_space<vmem>>, vector<128x128xf32>
    %cst_7 = arith.constant dense<0.000000e+00> : vector<8x128xf32>
    %7 = tpu.matmul %5, %6, %cst_7 {dimension_numbers = #tpu.dot_dimension_numbers<[1], [0], [0], [1], [0, 0, 1, 1], [], []>} : vector<8x128xf32>, vector<128x128xf32>, vector<8x128xf32> -> vector<8x128xf32>
    %c0_8 = arith.constant 0 : index
    %c0_9 = arith.constant 0 : index
    %8 = vector.load %arg5[%c0_8, %c0_9] : memref<1x128xf32, #tpu.memory_space<vmem>>, vector<1x128xf32>
    %9 = vector.broadcast %8 : vector<1x128xf32> to vector<8x128xf32>
    %10 = arith.addf %7, %9 : vector<8x128xf32>
    %c0_10 = arith.constant 0 : index
    %c0_11 = arith.constant 0 : index
    %11 = vector.load %arg6[%c0_10, %c0_11] : memref<128x128xf32, #tpu.memory_space<vmem>>, vector<128x128xf32>
    %cst_12 = arith.constant dense<0.000000e+00> : vector<8x128xf32>
    %12 = tpu.matmul %10, %11, %cst_12 {dimension_numbers = #tpu.dot_dimension_numbers<[1], [0], [0], [1], [0, 0, 1, 1], [], []>} : vector<8x128xf32>, vector<128x128xf32>, vector<8x128xf32> -> vector<8x128xf32>
    %c0_13 = arith.constant 0 : index
    %c0_14 = arith.constant 0 : index
    %13 = vector.load %arg7[%c0_13, %c0_14] : memref<1x128xf32, #tpu.memory_space<vmem>>, vector<1x128xf32>
    %14 = vector.broadcast %13 : vector<1x128xf32> to vector<8x128xf32>
    %15 = arith.addf %12, %14 : vector<8x128xf32>
    %c0_15 = arith.constant 0 : index
    %c0_16 = arith.constant 0 : index
    %16 = vector.load %arg8[%c0_15, %c0_16] : memref<8x128xf32, #tpu.memory_space<vmem>>, vector<8x128xf32>
    tpu.vector_store %arg8[%c0_15, %c0_16], %15 {strides = array<i32>} : memref<8x128xf32, #tpu.memory_space<vmem>>, vector<8x128xf32>,
    return
  }
  func.func @transform_0(%arg0: i32) -> (i32, i32) {
    %c0_i32 = arith.constant 0 : i32
    %c0_i32_0 = arith.constant 0 : i32
    return %arg0, %c0_i32 : i32, i32
  }
  func.func @transform_1(%arg0: i32) -> (i32, i32) {
    %c0_i32 = arith.constant 0 : i32
    %c0_i32_0 = arith.constant 0 : i32
    %c0_i32_1 = arith.constant 0 : i32
    return %c0_i32, %c0_i32_0 : i32, i32
  }
  func.func @transform_2(%arg0: i32) -> (i32, i32) {
    %c0_i32 = arith.constant 0 : i32
    %c0_i32_0 = arith.constant 0 : i32
    %c0_i32_1 = arith.constant 0 : i32
    return %c0_i32, %c0_i32_0 : i32, i32
  }
  func.func @transform_3(%arg0: i32) -> (i32, i32) {
    %c0_i32 = arith.constant 0 : i32
    %c0_i32_0 = arith.constant 0 : i32
    %c0_i32_1 = arith.constant 0 : i32
    return %c0_i32, %c0_i32_0 : i32, i32
  }
  func.func @transform_4(%arg0: i32) -> (i32, i32) {
    %c0_i32 = arith.constant 0 : i32
    %c0_i32_0 = arith.constant 0 : i32
    %c0_i32_1 = arith.constant 0 : i32
    return %c0_i32, %c0_i32_0 : i32, i32
  }
  func.func @transform_5(%arg0: i32) -> (i32, i32) {
    %c0_i32 = arith.constant 0 : i32
    %c0_i32_0 = arith.constant 0 : i32
    %c0_i32_1 = arith.constant 0 : i32
    return %c0_i32, %c0_i32_0 : i32, i32
  }
  func.func @transform_6(%arg0: i32) -> (i32, i32) {
    %c0_i32 = arith.constant 0 : i32
    %c0_i32_0 = arith.constant 0 : i32
    %c0_i32_1 = arith.constant 0 : i32
    return %c0_i32, %c0_i32_0 : i32, i32
  }
  func.func @transform_7(%arg0: i32) -> (i32, i32) {
    %c0_i32 = arith.constant 0 : i32
    %c0_i32_0 = arith.constant 0 : i32
    return %arg0, %c0_i32 : i32, i32
  }
}

module attributes {stable_mosaic.version = 11 : i64} {
  func.func @_mlp_kernel(%arg0: i32, %arg1: memref<8x128xf32, #tpu.memory_space<vmem>>, %arg2: memref<128x128xf32, #tpu.memory_space<vmem>>, %arg3: memref<1x128xf32, #tpu.memory_space<vmem>>, %arg4: memref<128x128xf32, #tpu.memory_space<vmem>>, %arg5: memref<1x128xf32, #tpu.memory_space<vmem>>, %arg6: memref<128x128xf32, #tpu.memory_space<vmem>>, %arg7: memref<1x128xf32, #tpu.memory_space<vmem>>, %arg8: memref<8x128xf32, #tpu.memory_space<vmem>>) attributes {dimension_semantics = [#tpu.dimension_semantics<parallel>], iteration_bounds = array<i64: 1>, scalar_prefetch = 0 : i64, scratch_operands = 0 : i64, tpu.core_type = #tpu.core_type<tc>, window_params = [{transform_indices = @transform_0, window_bounds = array<i64: 8, 128>}, {pipeline_mode = #tpu.pipeline_mode<synchronous>, transform_indices = @transform_1, window_bounds = array<i64: 128, 128>}, {pipeline_mode = #tpu.pipeline_mode<synchronous>, transform_indices = @transform_2, window_bounds = array<i64: 1, 128>}, {pipeline_mode = #tpu.pipeline_mode<synchronous>, transform_indices = @transform_3, window_bounds = array<i64: 128, 128>}, {pipeline_mode = #tpu.pipeline_mode<synchronous>, transform_indices = @transform_4, window_bounds = array<i64: 1, 128>}, {pipeline_mode = #tpu.pipeline_mode<synchronous>, transform_indices = @transform_5, window_bounds = array<i64: 128, 128>}, {pipeline_mode = #tpu.pipeline_mode<synchronous>, transform_indices = @transform_6, window_bounds = array<i64: 1, 128>}, {transform_indices = @transform_7, window_bounds = array<i64: 8, 128>}]} {
    %c0 = arith.constant 0 : index
    %c0_0 = arith.constant 0 : index
    %0 = vector.load %arg1[%c0, %c0_0] : memref<8x128xf32, #tpu.memory_space<vmem>>, vector<8x128xf32>
    %c0_1 = arith.constant 0 : index
    %c0_2 = arith.constant 0 : index
    %1 = vector.load %arg2[%c0_1, %c0_2] : memref<128x128xf32, #tpu.memory_space<vmem>>, vector<128x128xf32>
    %cst = arith.constant dense<0.000000e+00> : vector<8x128xf32>
    %2 = tpu.matmul %0, %1, %cst {dimension_numbers = #tpu.dot_dimension_numbers<[1], [0], [0], [1], [0, 0, 1, 1], [], []>} : vector<8x128xf32>, vector<128x128xf32>, vector<8x128xf32> -> vector<8x128xf32>
    %c0_3 = arith.constant 0 : index
    %c0_4 = arith.constant 0 : index
    %3 = vector.load %arg3[%c0_3, %c0_4] : memref<1x128xf32, #tpu.memory_space<vmem>>, vector<1x128xf32>
    %4 = vector.broadcast %3 : vector<1x128xf32> to vector<8x128xf32>
    %5 = arith.addf %2, %4 : vector<8x128xf32>
    %c0_5 = arith.constant 0 : index
    %c0_6 = arith.constant 0 : index
    %6 = vector.load %arg4[%c0_5, %c0_6] : memref<128x128xf32, #tpu.memory_space<vmem>>, vector<128x128xf32>
    %cst_7 = arith.constant dense<0.000000e+00> : vector<8x128xf32>
    %7 = tpu.matmul %5, %6, %cst_7 {dimension_numbers = #tpu.dot_dimension_numbers<[1], [0], [0], [1], [0, 0, 1, 1], [], []>} : vector<8x128xf32>, vector<128x128xf32>, vector<8x128xf32> -> vector<8x128xf32>
    %c0_8 = arith.constant 0 : index
    %c0_9 = arith.constant 0 : index
    %8 = vector.load %arg5[%c0_8, %c0_9] : memref<1x128xf32, #tpu.memory_space<vmem>>, vector<1x128xf32>
    %9 = vector.broadcast %8 : vector<1x128xf32> to vector<8x128xf32>
    %10 = arith.addf %7, %9 : vector<8x128xf32>
    %c0_10 = arith.constant 0 : index
    %c0_11 = arith.constant 0 : index
    %11 = vector.load %arg6[%c0_10, %c0_11] : memref<128x128xf32, #tpu.memory_space<vmem>>, vector<128x128xf32>
    %cst_12 = arith.constant dense<0.000000e+00> : vector<8x128xf32>
    %12 = tpu.matmul %10, %11, %cst_12 {dimension_numbers = #tpu.dot_dimension_numbers<[1], [0], [0], [1], [0, 0, 1, 1], [], []>} : vector<8x128xf32>, vector<128x128xf32>, vector<8x128xf32> -> vector<8x128xf32>
    %c0_13 = arith.constant 0 : index
    %c0_14 = arith.constant 0 : index
    %13 = vector.load %arg7[%c0_13, %c0_14] : memref<1x128xf32, #tpu.memory_space<vmem>>, vector<1x128xf32>
    %14 = vector.broadcast %13 : vector<1x128xf32> to vector<8x128xf32>
    %15 = arith.addf %12, %14 : vector<8x128xf32>
    %c0_15 = arith.constant 0 : index
    %c0_16 = arith.constant 0 : index
    %16 = vector.load %arg8[%c0_15, %c0_16] : memref<8x128xf32, #tpu.memory_space<vmem>>, vector<8x128xf32>
    tpu.vector_store %arg8[%c0_15, %c0_16], %15 {strides = array<i32>} : memref<8x128xf32, #tpu.memory_space<vmem>>, vector<8x128xf32>,
    return
  }
  func.func @transform_0(%arg0: i32) -> (i32, i32) {
    %c0_i32 = arith.constant 0 : i32
    %c0_i32_0 = arith.constant 0 : i32
    return %arg0, %c0_i32 : i32, i32
  }
  func.func @transform_1(%arg0: i32) -> (i32, i32) {
    %c0_i32 = arith.constant 0 : i32
    %c0_i32_0 = arith.constant 0 : i32
    %c0_i32_1 = arith.constant 0 : i32
    return %c0_i32, %c0_i32_0 : i32, i32
  }
  func.func @transform_2(%arg0: i32) -> (i32, i32) {
    %c0_i32 = arith.constant 0 : i32
    %c0_i32_0 = arith.constant 0 : i32
    %c0_i32_1 = arith.constant 0 : i32
    return %c0_i32, %c0_i32_0 : i32, i32
  }
  func.func @transform_3(%arg0: i32) -> (i32, i32) {
    %c0_i32 = arith.constant 0 : i32
    %c0_i32_0 = arith.constant 0 : i32
    %c0_i32_1 = arith.constant 0 : i32
    return %c0_i32, %c0_i32_0 : i32, i32
  }
  func.func @transform_4(%arg0: i32) -> (i32, i32) {
    %c0_i32 = arith.constant 0 : i32
    %c0_i32_0 = arith.constant 0 : i32
    %c0_i32_1 = arith.constant 0 : i32
    return %c0_i32, %c0_i32_0 : i32, i32
  }
  func.func @transform_5(%arg0: i32) -> (i32, i32) {
    %c0_i32 = arith.constant 0 : i32
    %c0_i32_0 = arith.constant 0 : i32
    %c0_i32_1 = arith.constant 0 : i32
    return %c0_i32, %c0_i32_0 : i32, i32
  }
  func.func @transform_6(%arg0: i32) -> (i32, i32) {
    %c0_i32 = arith.constant 0 : i32
    %c0_i32_0 = arith.constant 0 : i32
    %c0_i32_1 = arith.constant 0 : i32
    return %c0_i32, %c0_i32_0 : i32, i32
  }
  func.func @transform_7(%arg0: i32) -> (i32, i32) {
    %c0_i32 = arith.constant 0 : i32
    %c0_i32_0 = arith.constant 0 : i32
    return %arg0, %c0_i32 : i32, i32
  }
}

</mosaic_0001>

<llo_original>
// kernel: mlp_forward.1
$region0: #{mlp_forward.1}
  #allocation0 [shape = 'u32[]', space=smem, size = 0x4, offset = 0x4, fixed_abs, tag = 'smem constant byte address 0x4 - core index']
  #allocation1 [shape = 'u32[144,128]{1,0:T(1,128)}', space=vmem, size = 0x12000, scoped, tag = 'internal scratch']
  %s0 = inlined_call_operand.vmem [shape: f32[8,128], index: 0, kind: input, shape index: {}]
  %s1 = inlined_call_operand.vmem [shape: f32[128,128], index: 1, kind: input, shape index: {}]
  %s2 = inlined_call_operand.vmem [shape: f32[1,128], index: 2, kind: input, shape index: {}]
  %s3 = inlined_call_operand.vmem [shape: f32[128,128], index: 3, kind: input, shape index: {}]
  %s4 = inlined_call_operand.vmem [shape: f32[1,128], index: 4, kind: input, shape index: {}]
  %s5 = inlined_call_operand.vmem [shape: f32[128,128], index: 5, kind: input, shape index: {}]
  %s6 = inlined_call_operand.vmem [shape: f32[1,128], index: 6, kind: input, shape index: {}]
  %s7 = inlined_call_operand.hbm [shape: f32[8,128], index: 7, kind: output, shape index: {}]
  %s8 = sld [smem:[#allocation0]]
  $region38: #{mlp_forward.1} parent=0
    _
  %s10 = ssub.s32 1, %s8
  %s11 = scalar_select 0, %s10, %s8
  $region1: #{mlp_forward.1} parent=0
    #allocation2 [shape = 'u8[4096]{0}', space=vmem, size = 0x1000, scoped, tag = 'output window, operand 0, single buffered']
    #allocation3 [shape = 's32[1]{0}', space=sflag, size = 0x4, scoped, tag = 'scoped memory for mlp_forward.1']
    %12 = vsyncpa [#allocation3], 0
    // Predicated region
    $region2: #{mlp_forward.1} parent=1 // pred_check
      _
    $region3: #{mlp_forward.1} parent=1 // pred_check_branch
      %14 = sbr.rel (0) target = $region5
    $region4: #{mlp_forward.1} parent=1 // pred_region
      _
    $region5: #{mlp_forward.1} parent=1 // pred_fallthru
      _
    // Predicated region
    $region6: #{mlp_forward.1} parent=1 // pred_check
      _
    $region7: #{mlp_forward.1} parent=1 // pred_check_branch
      %16 = sbr.rel (0) target = $region9
    $region8: #{mlp_forward.1} parent=1 // pred_region
      _
    $region9: #{mlp_forward.1} parent=1 // pred_fallthru
      _
    // Predicated region
    $region10: #{mlp_forward.1} parent=1 // pred_check
      _
    $region11: #{mlp_forward.1} parent=1 // pred_check_branch
      %18 = sbr.rel (0) target = $region13
    $region12: #{mlp_forward.1} parent=1 // pred_region
      _
    $region13: #{mlp_forward.1} parent=1 // pred_fallthru
      _
    // Predicated region
    $region14: #{mlp_forward.1} parent=1 // pred_check
      _
    $region15: #{mlp_forward.1} parent=1 // pred_check_branch
      %20 = sbr.rel (0) target = $region17
    $region16: #{mlp_forward.1} parent=1 // pred_region
      _
    $region17: #{mlp_forward.1} parent=1 // pred_fallthru
      _
    // Predicated region
    $region18: #{mlp_forward.1} parent=1 // pred_check
      _
    $region19: #{mlp_forward.1} parent=1 // pred_check_branch
      %22 = sbr.rel (0) target = $region21
    $region20: #{mlp_forward.1} parent=1 // pred_region
      _
    $region21: #{mlp_forward.1} parent=1 // pred_fallthru
      _
    // Predicated region
    $region22: #{mlp_forward.1} parent=1 // pred_check
      _
    $region23: #{mlp_forward.1} parent=1 // pred_check_branch
      %24 = sbr.rel (0) target = $region25
    $region24: #{mlp_forward.1} parent=1 // pred_region
      _
    $region25: #{mlp_forward.1} parent=1 // pred_fallthru
      _
    // Predicated region
    $region26: #{mlp_forward.1} parent=1 // pred_check
      _
    $region27: #{mlp_forward.1} parent=1 // pred_check_branch
      %26 = sbr.rel (0) target = $region29
    $region28: #{mlp_forward.1} parent=1 // pred_region
      _
    $region29: #{mlp_forward.1} parent=1 // pred_fallthru
      _
    %v27 = vld [vmem:[%s0] sm:$0xff]
    %v28 = vld [vmem:[%s1] sm:$0xff]
    %v29 = vld [vmem:[%s1 + $0x8] sm:$0xff]
    %v30 = vld [vmem:[%s1 + $0x10] sm:$0xff]
    %v31 = vld [vmem:[%s1 + $0x18] sm:$0xff]
    %v32 = vld [vmem:[%s1 + $0x20] sm:$0xff]
    %v33 = vld [vmem:[%s1 + $0x28] sm:$0xff]
    %v34 = vld [vmem:[%s1 + $0x30] sm:$0xff]
    %v35 = vld [vmem:[%s1 + $0x38] sm:$0xff]
    %v36 = vld [vmem:[%s1 + $0x40] sm:$0xff]
    %v37 = vld [vmem:[%s1 + $0x48] sm:$0xff]
    %v38 = vld [vmem:[%s1 + $0x50] sm:$0xff]
    %v39 = vld [vmem:[%s1 + $0x58] sm:$0xff]
    %v40 = vld [vmem:[%s1 + $0x60] sm:$0xff]
    %v41 = vld [vmem:[%s1 + $0x68] sm:$0xff]
    %v42 = vld [vmem:[%s1 + $0x70] sm:$0xff]
    %v43 = vld [vmem:[%s1 + $0x78] sm:$0xff]
    %v44 = vld [vmem:[%s2] sm:$0x1]
    %v46 = vlaneseq
    %v47 = vshrl.u32 %v46, 7
    %v48 = vsub.s32 0, %v47
    %v49 = vrot.slane %v44, %v48
    %51 = vmatprep.subr.mxu0 0.0
    %52 = vmatpush1.msra.mxu0 %v28
    %53 = vmatprep.subr.mxu0 0.0
    %54 = vmatpush1.msra.mxu0 %v29
    %55 = vmatprep.subr.mxu0 0.0
    %56 = vmatpush1.msra.mxu0 %v30
    %57 = vmatprep.subr.mxu0 0.0
    %58 = vmatpush1.msra.mxu0 %v31
    %59 = vmatprep.subr.mxu0 0.0
    %60 = vmatpush1.msra.mxu0 %v32
    %61 = vmatprep.subr.mxu0 0.0
    %62 = vmatpush1.msra.mxu0 %v33
    %63 = vmatprep.subr.mxu0 0.0
    %64 = vmatpush1.msra.mxu0 %v34
    %65 = vmatprep.subr.mxu0 0.0
    %66 = vmatpush1.msra.mxu0 %v35
    %67 = vmatprep.subr.mxu0 0.0
    %68 = vmatpush1.msra.mxu0 %v36
    %69 = vmatprep.subr.mxu0 0.0
    %70 = vmatpush1.msra.mxu0 %v37
    %71 = vmatprep.subr.mxu0 0.0
    %72 = vmatpush1.msra.mxu0 %v38
    %73 = vmatprep.subr.mxu0 0.0
    %74 = vmatpush1.msra.mxu0 %v39
    %75 = vmatprep.subr.mxu0 0.0
    %76 = vmatpush1.msra.mxu0 %v40
    %77 = vmatprep.subr.mxu0 0.0
    %78 = vmatpush1.msra.mxu0 %v41
    %79 = vmatprep.subr.mxu0 0.0
    %80 = vmatpush1.msra.mxu0 %v42
    %81 = vmatprep.subr.mxu0 0.0
    %82 = vmatpush1.msra.mxu0 %v43
    %83 = vmatprep.subr.mxu0 0.0
    %84 = vmatpush1.msra.mxu0 0.0
    %85 = vmatprep.subr.mxu0 0.0
    %86 = vmatpush1.msra.mxu0 0.0
    %87 = vmatprep.subr.mxu0 0.0
    %88 = vmatpush1.msra.mxu0 0.0
    %89 = vmatprep.subr.mxu0 0.0
    %90 = vmatpush1.msra.mxu0 0.0
    %91 = vmatprep.subr.mxu0 0.0
    %92 = vmatpush1.msra.mxu0 0.0
    %93 = vmatprep.subr.mxu0 0.0
    %94 = vmatpush1.msra.mxu0 0.0
    %95 = vmatprep.subr.mxu0 0.0
    %96 = vmatpush1.msra.mxu0 0.0
    %97 = vmatprep.subr.mxu0 0.0
    %98 = vmatpush1.msra.mxu0 0.0
    %99 = vmatprep.subr.mxu0 0.0
    %100 = vmatpush1.msra.mxu0 0.0
    %101 = vmatprep.subr.mxu0 0.0
    %102 = vmatpush1.msra.mxu0 0.0
    %103 = vmatprep.subr.mxu0 0.0
    %104 = vmatpush1.msra.mxu0 0.0
    %105 = vmatprep.subr.mxu0 0.0
    %106 = vmatpush1.msra.mxu0 0.0
    %107 = vmatprep.subr.mxu0 0.0
    %108 = vmatpush1.msra.mxu0 0.0
    %109 = vmatprep.subr.mxu0 0.0
    %110 = vmatpush1.msra.mxu0 0.0
    %111 = vmatprep.subr.mxu0 0.0
    %112 = vmatpush1.msra.mxu0 0.0
    %113 = vmatprep.subr.mxu0 0.0
    %114 = vmatpush1.msra.mxu0 0.0
    %115 = vmatprep.mubr.f32.mxu0 0.0
    %116 = vmatmul.mubr.f32.gmra.mrb[0].mxu0 %v27
    %v117 = vpop.f32.mrb[0].mxu0
    %v118 = vadd.f32 %v49, %v117
    %v119 = vpop.f32.mrb[0].mxu0
    %120 = vdwg.mxu0
    %v121 = vld [vmem:[%s3] sm:$0xff]
    %v122 = vld [vmem:[%s3 + $0x8] sm:$0xff]
    %v123 = vld [vmem:[%s3 + $0x10] sm:$0xff]
    %v124 = vld [vmem:[%s3 + $0x18] sm:$0xff]
    %v125 = vld [vmem:[%s3 + $0x20] sm:$0xff]
    %v126 = vld [vmem:[%s3 + $0x28] sm:$0xff]
    %v127 = vld [vmem:[%s3 + $0x30] sm:$0xff]
    %v128 = vld [vmem:[%s3 + $0x38] sm:$0xff]
    %v129 = vld [vmem:[%s3 + $0x40] sm:$0xff]
    %v130 = vld [vmem:[%s3 + $0x48] sm:$0xff]
    %v131 = vld [vmem:[%s3 + $0x50] sm:$0xff]
    %v132 = vld [vmem:[%s3 + $0x58] sm:$0xff]
    %v133 = vld [vmem:[%s3 + $0x60] sm:$0xff]
    %v134 = vld [vmem:[%s3 + $0x68] sm:$0xff]
    %v135 = vld [vmem:[%s3 + $0x70] sm:$0xff]
    %v136 = vld [vmem:[%s3 + $0x78] sm:$0xff]
    %v137 = vld [vmem:[%s4] sm:$0x1]
    %v139 = vlaneseq
    %v140 = vshrl.u32 %v139, 7
    %v141 = vsub.s32 0, %v140
    %v142 = vrot.slane %v137, %v141
    %144 = vmatprep.subr.mxu0 0.0
    %145 = vmatpush1.msra.mxu0 %v121
    %146 = vmatprep.subr.mxu0 0.0
    %147 = vmatpush1.msra.mxu0 %v122
    %148 = vmatprep.subr.mxu0 0.0
    %149 = vmatpush1.msra.mxu0 %v123
    %150 = vmatprep.subr.mxu0 0.0
    %151 = vmatpush1.msra.mxu0 %v124
    %152 = vmatprep.subr.mxu0 0.0
    %153 = vmatpush1.msra.mxu0 %v125
    %154 = vmatprep.subr.mxu0 0.0
    %155 = vmatpush1.msra.mxu0 %v126
    %156 = vmatprep.subr.mxu0 0.0
    %157 = vmatpush1.msra.mxu0 %v127
    %158 = vmatprep.subr.mxu0 0.0
    %159 = vmatpush1.msra.mxu0 %v128
    %160 = vmatprep.subr.mxu0 0.0
    %161 = vmatpush1.msra.mxu0 %v129
    %162 = vmatprep.subr.mxu0 0.0
    %163 = vmatpush1.msra.mxu0 %v130
    %164 = vmatprep.subr.mxu0 0.0
    %165 = vmatpush1.msra.mxu0 %v131
    %166 = vmatprep.subr.mxu0 0.0
    %167 = vmatpush1.msra.mxu0 %v132
    %168 = vmatprep.subr.mxu0 0.0
    %169 = vmatpush1.msra.mxu0 %v133
    %170 = vmatprep.subr.mxu0 0.0
    %171 = vmatpush1.msra.mxu0 %v134
    %172 = vmatprep.subr.mxu0 0.0
    %173 = vmatpush1.msra.mxu0 %v135
    %174 = vmatprep.subr.mxu0 0.0
    %175 = vmatpush1.msra.mxu0 %v136
    %176 = vmatprep.subr.mxu0 0.0
    %177 = vmatpush1.msra.mxu0 0.0
    %178 = vmatprep.subr.mxu0 0.0
    %179 = vmatpush1.msra.mxu0 0.0
    %180 = vmatprep.subr.mxu0 0.0
    %181 = vmatpush1.msra.mxu0 0.0
    %182 = vmatprep.subr.mxu0 0.0
    %183 = vmatpush1.msra.mxu0 0.0
    %184 = vmatprep.subr.mxu0 0.0
    %185 = vmatpush1.msra.mxu0 0.0
    %186 = vmatprep.subr.mxu0 0.0
    %187 = vmatpush1.msra.mxu0 0.0
    %188 = vmatprep.subr.mxu0 0.0
    %189 = vmatpush1.msra.mxu0 0.0
    %190 = vmatprep.subr.mxu0 0.0
    %191 = vmatpush1.msra.mxu0 0.0
    %192 = vmatprep.subr.mxu0 0.0
    %193 = vmatpush1.msra.mxu0 0.0
    %194 = vmatprep.subr.mxu0 0.0
    %195 = vmatpush1.msra.mxu0 0.0
    %196 = vmatprep.subr.mxu0 0.0
    %197 = vmatpush1.msra.mxu0 0.0
    %198 = vmatprep.subr.mxu0 0.0
    %199 = vmatpush1.msra.mxu0 0.0
    %200 = vmatprep.subr.mxu0 0.0
    %201 = vmatpush1.msra.mxu0 0.0
    %202 = vmatprep.subr.mxu0 0.0
    %203 = vmatpush1.msra.mxu0 0.0
    %204 = vmatprep.subr.mxu0 0.0
    %205 = vmatpush1.msra.mxu0 0.0
    %206 = vmatprep.subr.mxu0 0.0
    %207 = vmatpush1.msra.mxu0 0.0
    %208 = vmatprep.mubr.f32.mxu0 0.0
    %209 = vmatmul.mubr.f32.gmra.mrb[0].mxu0 %v118
    %v210 = vpop.f32.mrb[0].mxu0
    %v211 = vadd.f32 %v142, %v210
    %v212 = vpop.f32.mrb[0].mxu0
    %213 = vdwg.mxu0
    %v214 = vld [vmem:[%s5] sm:$0xff]
    %v215 = vld [vmem:[%s5 + $0x8] sm:$0xff]
    %v216 = vld [vmem:[%s5 + $0x10] sm:$0xff]
    %v217 = vld [vmem:[%s5 + $0x18] sm:$0xff]
    %v218 = vld [vmem:[%s5 + $0x20] sm:$0xff]
    %v219 = vld [vmem:[%s5 + $0x28] sm:$0xff]
    %v220 = vld [vmem:[%s5 + $0x30] sm:$0xff]
    %v221 = vld [vmem:[%s5 + $0x38] sm:$0xff]
    %v222 = vld [vmem:[%s5 + $0x40] sm:$0xff]
    %v223 = vld [vmem:[%s5 + $0x48] sm:$0xff]
    %v224 = vld [vmem:[%s5 + $0x50] sm:$0xff]
    %v225 = vld [vmem:[%s5 + $0x58] sm:$0xff]
    %v226 = vld [vmem:[%s5 + $0x60] sm:$0xff]
    %v227 = vld [vmem:[%s5 + $0x68] sm:$0xff]
    %v228 = vld [vmem:[%s5 + $0x70] sm:$0xff]
    %v229 = vld [vmem:[%s5 + $0x78] sm:$0xff]
    %v230 = vld [vmem:[%s6] sm:$0x1]
    %v232 = vlaneseq
    %v233 = vshrl.u32 %v232, 7
    %v234 = vsub.s32 0, %v233
    %v235 = vrot.slane %v230, %v234
    %237 = vmatprep.subr.mxu0 0.0
    %238 = vmatpush1.msra.mxu0 %v214
    %239 = vmatprep.subr.mxu0 0.0
    %240 = vmatpush1.msra.mxu0 %v215
    %241 = vmatprep.subr.mxu0 0.0
    %242 = vmatpush1.msra.mxu0 %v216
    %243 = vmatprep.subr.mxu0 0.0
    %244 = vmatpush1.msra.mxu0 %v217
    %245 = vmatprep.subr.mxu0 0.0
    %246 = vmatpush1.msra.mxu0 %v218
    %247 = vmatprep.subr.mxu0 0.0
    %248 = vmatpush1.msra.mxu0 %v219
    %249 = vmatprep.subr.mxu0 0.0
    %250 = vmatpush1.msra.mxu0 %v220
    %251 = vmatprep.subr.mxu0 0.0
    %252 = vmatpush1.msra.mxu0 %v221
    %253 = vmatprep.subr.mxu0 0.0
    %254 = vmatpush1.msra.mxu0 %v222
    %255 = vmatprep.subr.mxu0 0.0
    %256 = vmatpush1.msra.mxu0 %v223
    %257 = vmatprep.subr.mxu0 0.0
    %258 = vmatpush1.msra.mxu0 %v224
    %259 = vmatprep.subr.mxu0 0.0
    %260 = vmatpush1.msra.mxu0 %v225
    %261 = vmatprep.subr.mxu0 0.0
    %262 = vmatpush1.msra.mxu0 %v226
    %263 = vmatprep.subr.mxu0 0.0
    %264 = vmatpush1.msra.mxu0 %v227
    %265 = vmatprep.subr.mxu0 0.0
    %266 = vmatpush1.msra.mxu0 %v228
    %267 = vmatprep.subr.mxu0 0.0
    %268 = vmatpush1.msra.mxu0 %v229
    %269 = vmatprep.subr.mxu0 0.0
    %270 = vmatpush1.msra.mxu0 0.0
    %271 = vmatprep.subr.mxu0 0.0
    %272 = vmatpush1.msra.mxu0 0.0
    %273 = vmatprep.subr.mxu0 0.0
    %274 = vmatpush1.msra.mxu0 0.0
    %275 = vmatprep.subr.mxu0 0.0
    %276 = vmatpush1.msra.mxu0 0.0
    %277 = vmatprep.subr.mxu0 0.0
    %278 = vmatpush1.msra.mxu0 0.0
    %279 = vmatprep.subr.mxu0 0.0
    %280 = vmatpush1.msra.mxu0 0.0
    %281 = vmatprep.subr.mxu0 0.0
    %282 = vmatpush1.msra.mxu0 0.0
    %283 = vmatprep.subr.mxu0 0.0
    %284 = vmatpush1.msra.mxu0 0.0
    %285 = vmatprep.subr.mxu0 0.0
    %286 = vmatpush1.msra.mxu0 0.0
    %287 = vmatprep.subr.mxu0 0.0
    %288 = vmatpush1.msra.mxu0 0.0
    %289 = vmatprep.subr.mxu0 0.0
    %290 = vmatpush1.msra.mxu0 0.0
    %291 = vmatprep.subr.mxu0 0.0
    %292 = vmatpush1.msra.mxu0 0.0
    %293 = vmatprep.subr.mxu0 0.0
    %294 = vmatpush1.msra.mxu0 0.0
    %295 = vmatprep.subr.mxu0 0.0
    %296 = vmatpush1.msra.mxu0 0.0
    %297 = vmatprep.subr.mxu0 0.0
    %298 = vmatpush1.msra.mxu0 0.0
    %299 = vmatprep.subr.mxu0 0.0
    %300 = vmatpush1.msra.mxu0 0.0
    %301 = vmatprep.mubr.f32.mxu0 0.0
    %302 = vmatmul.mubr.f32.gmra.mrb[0].mxu0 %v211
    %v303 = vpop.f32.mrb[0].mxu0
    %v304 = vadd.f32 %v235, %v303
    %v305 = vpop.f32.mrb[0].mxu0
    %306 = vdwg.mxu0
    %307 = vst [vmem:[#allocation2] sm:$0xff] %v304
    // Predicated region
    $region30: #{mlp_forward.1} parent=1 // pred_check
      _
    $region31: #{mlp_forward.1} parent=1 // pred_check_branch
      %309 = sbr.rel (0) target = $region33
    $region32: #{mlp_forward.1} parent=1 // pred_region
      %s311 = ssub.s32 128, 128
      %312 = vsyncadd [#allocation3], %s311
      %s314 = sshll.u32 [#allocation2], 4
      %s315 = int_to_ptr.vmem [resolvable:$true] %s314
      %317 = dma.vmem_to_hbm [thread:$0]  %s315, 128, %s7, [#allocation3]
    $region33: #{mlp_forward.1} parent=1 // pred_fallthru
      _
    // Predicated region
    $region34: #{mlp_forward.1} parent=1 // pred_check
      _
    $region35: #{mlp_forward.1} parent=1 // pred_check_branch
      %319 = sbr.rel (0) target = $region37
    $region36: #{mlp_forward.1} parent=1 // pred_region
      %320 = dma.done [#allocation3], 128
    $region37: #{mlp_forward.1} parent=1 // pred_fallthru
      _
    %321 = vsyncpa [#allocation3], 1

// kernel: mlp_forward.1
$region0: #{mlp_forward.1}
  #allocation0 [shape = 'u32[]', space=smem, size = 0x4, offset = 0x4, fixed_abs, tag = 'smem constant byte address 0x4 - core index']
  #allocation1 [shape = 'u32[144,128]{1,0:T(1,128)}', space=vmem, size = 0x12000, scoped, tag = 'internal scratch']
  %s0 = inlined_call_operand.vmem [shape: f32[8,128], index: 0, kind: input, shape index: {}]
  %s1 = inlined_call_operand.vmem [shape: f32[128,128], index: 1, kind: input, shape index: {}]
  %s2 = inlined_call_operand.vmem [shape: f32[1,128], index: 2, kind: input, shape index: {}]
  %s3 = inlined_call_operand.vmem [shape: f32[128,128], index: 3, kind: input, shape index: {}]
  %s4 = inlined_call_operand.vmem [shape: f32[1,128], index: 4, kind: input, shape index: {}]
  %s5 = inlined_call_operand.vmem [shape: f32[128,128], index: 5, kind: input, shape index: {}]
  %s6 = inlined_call_operand.vmem [shape: f32[1,128], index: 6, kind: input, shape index: {}]
  %s7 = inlined_call_operand.hbm [shape: f32[8,128], index: 7, kind: output, shape index: {}]
  %s8 = sld [smem:[#allocation0]]
  $region38: #{mlp_forward.1} parent=0
    _
  %s10 = ssub.s32 1, %s8
  %s11 = scalar_select 0, %s10, %s8
  $region1: #{mlp_forward.1} parent=0
    #allocation2 [shape = 'u8[4096]{0}', space=vmem, size = 0x1000, scoped, tag = 'output window, operand 0, single buffered']
    #allocation3 [shape = 's32[1]{0}', space=sflag, size = 0x4, scoped, tag = 'scoped memory for mlp_forward.1']
    %12 = vsyncpa [#allocation3], 0
    // Predicated region
    $region2: #{mlp_forward.1} parent=1 // pred_check
      _
    $region3: #{mlp_forward.1} parent=1 // pred_check_branch
      %14 = sbr.rel (0) target = $region5
    $region4: #{mlp_forward.1} parent=1 // pred_region
      _
    $region5: #{mlp_forward.1} parent=1 // pred_fallthru
      _
    // Predicated region
    $region6: #{mlp_forward.1} parent=1 // pred_check
      _
    $region7: #{mlp_forward.1} parent=1 // pred_check_branch
      %16 = sbr.rel (0) target = $region9
    $region8: #{mlp_forward.1} parent=1 // pred_region
      _
    $region9: #{mlp_forward.1} parent=1 // pred_fallthru
      _
    // Predicated region
    $region10: #{mlp_forward.1} parent=1 // pred_check
      _
    $region11: #{mlp_forward.1} parent=1 // pred_check_branch
      %18 = sbr.rel (0) target = $region13
    $region12: #{mlp_forward.1} parent=1 // pred_region
      _
    $region13: #{mlp_forward.1} parent=1 // pred_fallthru
      _
    // Predicated region
    $region14: #{mlp_forward.1} parent=1 // pred_check
      _
    $region15: #{mlp_forward.1} parent=1 // pred_check_branch
      %20 = sbr.rel (0) target = $region17
    $region16: #{mlp_forward.1} parent=1 // pred_region
      _
    $region17: #{mlp_forward.1} parent=1 // pred_fallthru
      _
    // Predicated region
    $region18: #{mlp_forward.1} parent=1 // pred_check
      _
    $region19: #{mlp_forward.1} parent=1 // pred_check_branch
      %22 = sbr.rel (0) target = $region21
    $region20: #{mlp_forward.1} parent=1 // pred_region
      _
    $region21: #{mlp_forward.1} parent=1 // pred_fallthru
      _
    // Predicated region
    $region22: #{mlp_forward.1} parent=1 // pred_check
      _
    $region23: #{mlp_forward.1} parent=1 // pred_check_branch
      %24 = sbr.rel (0) target = $region25
    $region24: #{mlp_forward.1} parent=1 // pred_region
      _
    $region25: #{mlp_forward.1} parent=1 // pred_fallthru
      _
    // Predicated region
    $region26: #{mlp_forward.1} parent=1 // pred_check
      _
    $region27: #{mlp_forward.1} parent=1 // pred_check_branch
      %26 = sbr.rel (0) target = $region29
    $region28: #{mlp_forward.1} parent=1 // pred_region
      _
    $region29: #{mlp_forward.1} parent=1 // pred_fallthru
      _
    %v27 = vld [vmem:[%s0] sm:$0xff]
    %v28 = vld [vmem:[%s1] sm:$0xff]
    %v29 = vld [vmem:[%s1 + $0x8] sm:$0xff]
    %v30 = vld [vmem:[%s1 + $0x10] sm:$0xff]
    %v31 = vld [vmem:[%s1 + $0x18] sm:$0xff]
    %v32 = vld [vmem:[%s1 + $0x20] sm:$0xff]
    %v33 = vld [vmem:[%s1 + $0x28] sm:$0xff]
    %v34 = vld [vmem:[%s1 + $0x30] sm:$0xff]
    %v35 = vld [vmem:[%s1 + $0x38] sm:$0xff]
    %v36 = vld [vmem:[%s1 + $0x40] sm:$0xff]
    %v37 = vld [vmem:[%s1 + $0x48] sm:$0xff]
    %v38 = vld [vmem:[%s1 + $0x50] sm:$0xff]
    %v39 = vld [vmem:[%s1 + $0x58] sm:$0xff]
    %v40 = vld [vmem:[%s1 + $0x60] sm:$0xff]
    %v41 = vld [vmem:[%s1 + $0x68] sm:$0xff]
    %v42 = vld [vmem:[%s1 + $0x70] sm:$0xff]
    %v43 = vld [vmem:[%s1 + $0x78] sm:$0xff]
    %v44 = vld [vmem:[%s2] sm:$0x1]
    %v46 = vlaneseq
    %v47 = vshrl.u32 %v46, 7
    %v48 = vsub.s32 0, %v47
    %v49 = vrot.slane %v44, %v48
    %51 = vmatprep.subr.mxu0 0.0
    %52 = vmatpush1.msra.mxu0 %v28
    %53 = vmatprep.subr.mxu0 0.0
    %54 = vmatpush1.msra.mxu0 %v29
    %55 = vmatprep.subr.mxu0 0.0
    %56 = vmatpush1.msra.mxu0 %v30
    %57 = vmatprep.subr.mxu0 0.0
    %58 = vmatpush1.msra.mxu0 %v31
    %59 = vmatprep.subr.mxu0 0.0
    %60 = vmatpush1.msra.mxu0 %v32
    %61 = vmatprep.subr.mxu0 0.0
    %62 = vmatpush1.msra.mxu0 %v33
    %63 = vmatprep.subr.mxu0 0.0
    %64 = vmatpush1.msra.mxu0 %v34
    %65 = vmatprep.subr.mxu0 0.0
    %66 = vmatpush1.msra.mxu0 %v35
    %67 = vmatprep.subr.mxu0 0.0
    %68 = vmatpush1.msra.mxu0 %v36
    %69 = vmatprep.subr.mxu0 0.0
    %70 = vmatpush1.msra.mxu0 %v37
    %71 = vmatprep.subr.mxu0 0.0
    %72 = vmatpush1.msra.mxu0 %v38
    %73 = vmatprep.subr.mxu0 0.0
    %74 = vmatpush1.msra.mxu0 %v39
    %75 = vmatprep.subr.mxu0 0.0
    %76 = vmatpush1.msra.mxu0 %v40
    %77 = vmatprep.subr.mxu0 0.0
    %78 = vmatpush1.msra.mxu0 %v41
    %79 = vmatprep.subr.mxu0 0.0
    %80 = vmatpush1.msra.mxu0 %v42
    %81 = vmatprep.subr.mxu0 0.0
    %82 = vmatpush1.msra.mxu0 %v43
    %83 = vmatprep.subr.mxu0 0.0
    %84 = vmatpush1.msra.mxu0 0.0
    %85 = vmatprep.subr.mxu0 0.0
    %86 = vmatpush1.msra.mxu0 0.0
    %87 = vmatprep.subr.mxu0 0.0
    %88 = vmatpush1.msra.mxu0 0.0
    %89 = vmatprep.subr.mxu0 0.0
    %90 = vmatpush1.msra.mxu0 0.0
    %91 = vmatprep.subr.mxu0 0.0
    %92 = vmatpush1.msra.mxu0 0.0
    %93 = vmatprep.subr.mxu0 0.0
    %94 = vmatpush1.msra.mxu0 0.0
    %95 = vmatprep.subr.mxu0 0.0
    %96 = vmatpush1.msra.mxu0 0.0
    %97 = vmatprep.subr.mxu0 0.0
    %98 = vmatpush1.msra.mxu0 0.0
    %99 = vmatprep.subr.mxu0 0.0
    %100 = vmatpush1.msra.mxu0 0.0
    %101 = vmatprep.subr.mxu0 0.0
    %102 = vmatpush1.msra.mxu0 0.0
    %103 = vmatprep.subr.mxu0 0.0
    %104 = vmatpush1.msra.mxu0 0.0
    %105 = vmatprep.subr.mxu0 0.0
    %106 = vmatpush1.msra.mxu0 0.0
    %107 = vmatprep.subr.mxu0 0.0
    %108 = vmatpush1.msra.mxu0 0.0
    %109 = vmatprep.subr.mxu0 0.0
    %110 = vmatpush1.msra.mxu0 0.0
    %111 = vmatprep.subr.mxu0 0.0
    %112 = vmatpush1.msra.mxu0 0.0
    %113 = vmatprep.subr.mxu0 0.0
    %114 = vmatpush1.msra.mxu0 0.0
    %115 = vmatprep.mubr.f32.mxu0 0.0
    %116 = vmatmul.mubr.f32.gmra.mrb[0].mxu0 %v27
    %v117 = vpop.f32.mrb[0].mxu0
    %v118 = vadd.f32 %v49, %v117
    %v119 = vpop.f32.mrb[0].mxu0
    %120 = vdwg.mxu0
    %v121 = vld [vmem:[%s3] sm:$0xff]
    %v122 = vld [vmem:[%s3 + $0x8] sm:$0xff]
    %v123 = vld [vmem:[%s3 + $0x10] sm:$0xff]
    %v124 = vld [vmem:[%s3 + $0x18] sm:$0xff]
    %v125 = vld [vmem:[%s3 + $0x20] sm:$0xff]
    %v126 = vld [vmem:[%s3 + $0x28] sm:$0xff]
    %v127 = vld [vmem:[%s3 + $0x30] sm:$0xff]
    %v128 = vld [vmem:[%s3 + $0x38] sm:$0xff]
    %v129 = vld [vmem:[%s3 + $0x40] sm:$0xff]
    %v130 = vld [vmem:[%s3 + $0x48] sm:$0xff]
    %v131 = vld [vmem:[%s3 + $0x50] sm:$0xff]
    %v132 = vld [vmem:[%s3 + $0x58] sm:$0xff]
    %v133 = vld [vmem:[%s3 + $0x60] sm:$0xff]
    %v134 = vld [vmem:[%s3 + $0x68] sm:$0xff]
    %v135 = vld [vmem:[%s3 + $0x70] sm:$0xff]
    %v136 = vld [vmem:[%s3 + $0x78] sm:$0xff]
    %v137 = vld [vmem:[%s4] sm:$0x1]
    %v139 = vlaneseq
    %v140 = vshrl.u32 %v139, 7
    %v141 = vsub.s32 0, %v140
    %v142 = vrot.slane %v137, %v141
    %144 = vmatprep.subr.mxu0 0.0
    %145 = vmatpush1.msra.mxu0 %v121
    %146 = vmatprep.subr.mxu0 0.0
    %147 = vmatpush1.msra.mxu0 %v122
    %148 = vmatprep.subr.mxu0 0.0
    %149 = vmatpush1.msra.mxu0 %v123
    %150 = vmatprep.subr.mxu0 0.0
    %151 = vmatpush1.msra.mxu0 %v124
    %152 = vmatprep.subr.mxu0 0.0
    %153 = vmatpush1.msra.mxu0 %v125
    %154 = vmatprep.subr.mxu0 0.0
    %155 = vmatpush1.msra.mxu0 %v126
    %156 = vmatprep.subr.mxu0 0.0
    %157 = vmatpush1.msra.mxu0 %v127
    %158 = vmatprep.subr.mxu0 0.0
    %159 = vmatpush1.msra.mxu0 %v128
    %160 = vmatprep.subr.mxu0 0.0
    %161 = vmatpush1.msra.mxu0 %v129
    %162 = vmatprep.subr.mxu0 0.0
    %163 = vmatpush1.msra.mxu0 %v130
    %164 = vmatprep.subr.mxu0 0.0
    %165 = vmatpush1.msra.mxu0 %v131
    %166 = vmatprep.subr.mxu0 0.0
    %167 = vmatpush1.msra.mxu0 %v132
    %168 = vmatprep.subr.mxu0 0.0
    %169 = vmatpush1.msra.mxu0 %v133
    %170 = vmatprep.subr.mxu0 0.0
    %171 = vmatpush1.msra.mxu0 %v134
    %172 = vmatprep.subr.mxu0 0.0
    %173 = vmatpush1.msra.mxu0 %v135
    %174 = vmatprep.subr.mxu0 0.0
    %175 = vmatpush1.msra.mxu0 %v136
    %176 = vmatprep.subr.mxu0 0.0
    %177 = vmatpush1.msra.mxu0 0.0
    %178 = vmatprep.subr.mxu0 0.0
    %179 = vmatpush1.msra.mxu0 0.0
    %180 = vmatprep.subr.mxu0 0.0
    %181 = vmatpush1.msra.mxu0 0.0
    %182 = vmatprep.subr.mxu0 0.0
    %183 = vmatpush1.msra.mxu0 0.0
    %184 = vmatprep.subr.mxu0 0.0
    %185 = vmatpush1.msra.mxu0 0.0
    %186 = vmatprep.subr.mxu0 0.0
    %187 = vmatpush1.msra.mxu0 0.0
    %188 = vmatprep.subr.mxu0 0.0
    %189 = vmatpush1.msra.mxu0 0.0
    %190 = vmatprep.subr.mxu0 0.0
    %191 = vmatpush1.msra.mxu0 0.0
    %192 = vmatprep.subr.mxu0 0.0
    %193 = vmatpush1.msra.mxu0 0.0
    %194 = vmatprep.subr.mxu0 0.0
    %195 = vmatpush1.msra.mxu0 0.0
    %196 = vmatprep.subr.mxu0 0.0
    %197 = vmatpush1.msra.mxu0 0.0
    %198 = vmatprep.subr.mxu0 0.0
    %199 = vmatpush1.msra.mxu0 0.0
    %200 = vmatprep.subr.mxu0 0.0
    %201 = vmatpush1.msra.mxu0 0.0
    %202 = vmatprep.subr.mxu0 0.0
    %203 = vmatpush1.msra.mxu0 0.0
    %204 = vmatprep.subr.mxu0 0.0
    %205 = vmatpush1.msra.mxu0 0.0
    %206 = vmatprep.subr.mxu0 0.0
    %207 = vmatpush1.msra.mxu0 0.0
    %208 = vmatprep.mubr.f32.mxu0 0.0
    %209 = vmatmul.mubr.f32.gmra.mrb[0].mxu0 %v118
    %v210 = vpop.f32.mrb[0].mxu0
    %v211 = vadd.f32 %v142, %v210
    %v212 = vpop.f32.mrb[0].mxu0
    %213 = vdwg.mxu0
    %v214 = vld [vmem:[%s5] sm:$0xff]
    %v215 = vld [vmem:[%s5 + $0x8] sm:$0xff]
    %v216 = vld [vmem:[%s5 + $0x10] sm:$0xff]
    %v217 = vld [vmem:[%s5 + $0x18] sm:$0xff]
    %v218 = vld [vmem:[%s5 + $0x20] sm:$0xff]
    %v219 = vld [vmem:[%s5 + $0x28] sm:$0xff]
    %v220 = vld [vmem:[%s5 + $0x30] sm:$0xff]
    %v221 = vld [vmem:[%s5 + $0x38] sm:$0xff]
    %v222 = vld [vmem:[%s5 + $0x40] sm:$0xff]
    %v223 = vld [vmem:[%s5 + $0x48] sm:$0xff]
    %v224 = vld [vmem:[%s5 + $0x50] sm:$0xff]
    %v225 = vld [vmem:[%s5 + $0x58] sm:$0xff]
    %v226 = vld [vmem:[%s5 + $0x60] sm:$0xff]
    %v227 = vld [vmem:[%s5 + $0x68] sm:$0xff]
    %v228 = vld [vmem:[%s5 + $0x70] sm:$0xff]
    %v229 = vld [vmem:[%s5 + $0x78] sm:$0xff]
    %v230 = vld [vmem:[%s6] sm:$0x1]
    %v232 = vlaneseq
    %v233 = vshrl.u32 %v232, 7
    %v234 = vsub.s32 0, %v233
    %v235 = vrot.slane %v230, %v234
    %237 = vmatprep.subr.mxu0 0.0
    %238 = vmatpush1.msra.mxu0 %v214
    %239 = vmatprep.subr.mxu0 0.0
    %240 = vmatpush1.msra.mxu0 %v215
    %241 = vmatprep.subr.mxu0 0.0
    %242 = vmatpush1.msra.mxu0 %v216
    %243 = vmatprep.subr.mxu0 0.0
    %244 = vmatpush1.msra.mxu0 %v217
    %245 = vmatprep.subr.mxu0 0.0
    %246 = vmatpush1.msra.mxu0 %v218
    %247 = vmatprep.subr.mxu0 0.0
    %248 = vmatpush1.msra.mxu0 %v219
    %249 = vmatprep.subr.mxu0 0.0
    %250 = vmatpush1.msra.mxu0 %v220
    %251 = vmatprep.subr.mxu0 0.0
    %252 = vmatpush1.msra.mxu0 %v221
    %253 = vmatprep.subr.mxu0 0.0
    %254 = vmatpush1.msra.mxu0 %v222
    %255 = vmatprep.subr.mxu0 0.0
    %256 = vmatpush1.msra.mxu0 %v223
    %257 = vmatprep.subr.mxu0 0.0
    %258 = vmatpush1.msra.mxu0 %v224
    %259 = vmatprep.subr.mxu0 0.0
    %260 = vmatpush1.msra.mxu0 %v225
    %261 = vmatprep.subr.mxu0 0.0
    %262 = vmatpush1.msra.mxu0 %v226
    %263 = vmatprep.subr.mxu0 0.0
    %264 = vmatpush1.msra.mxu0 %v227
    %265 = vmatprep.subr.mxu0 0.0
    %266 = vmatpush1.msra.mxu0 %v228
    %267 = vmatprep.subr.mxu0 0.0
    %268 = vmatpush1.msra.mxu0 %v229
    %269 = vmatprep.subr.mxu0 0.0
    %270 = vmatpush1.msra.mxu0 0.0
    %271 = vmatprep.subr.mxu0 0.0
    %272 = vmatpush1.msra.mxu0 0.0
    %273 = vmatprep.subr.mxu0 0.0
    %274 = vmatpush1.msra.mxu0 0.0
    %275 = vmatprep.subr.mxu0 0.0
    %276 = vmatpush1.msra.mxu0 0.0
    %277 = vmatprep.subr.mxu0 0.0
    %278 = vmatpush1.msra.mxu0 0.0
    %279 = vmatprep.subr.mxu0 0.0
    %280 = vmatpush1.msra.mxu0 0.0
    %281 = vmatprep.subr.mxu0 0.0
    %282 = vmatpush1.msra.mxu0 0.0
    %283 = vmatprep.subr.mxu0 0.0
    %284 = vmatpush1.msra.mxu0 0.0
    %285 = vmatprep.subr.mxu0 0.0
    %286 = vmatpush1.msra.mxu0 0.0
    %287 = vmatprep.subr.mxu0 0.0
    %288 = vmatpush1.msra.mxu0 0.0
    %289 = vmatprep.subr.mxu0 0.0
    %290 = vmatpush1.msra.mxu0 0.0
    %291 = vmatprep.subr.mxu0 0.0
    %292 = vmatpush1.msra.mxu0 0.0
    %293 = vmatprep.subr.mxu0 0.0
    %294 = vmatpush1.msra.mxu0 0.0
    %295 = vmatprep.subr.mxu0 0.0
    %296 = vmatpush1.msra.mxu0 0.0
    %297 = vmatprep.subr.mxu0 0.0
    %298 = vmatpush1.msra.mxu0 0.0
    %299 = vmatprep.subr.mxu0 0.0
    %300 = vmatpush1.msra.mxu0 0.0
    %301 = vmatprep.mubr.f32.mxu0 0.0
    %302 = vmatmul.mubr.f32.gmra.mrb[0].mxu0 %v211
    %v303 = vpop.f32.mrb[0].mxu0
    %v304 = vadd.f32 %v235, %v303
    %v305 = vpop.f32.mrb[0].mxu0
    %306 = vdwg.mxu0
    %307 = vst [vmem:[#allocation2] sm:$0xff] %v304
    // Predicated region
    $region30: #{mlp_forward.1} parent=1 // pred_check
      _
    $region31: #{mlp_forward.1} parent=1 // pred_check_branch
      %309 = sbr.rel (0) target = $region33
    $region32: #{mlp_forward.1} parent=1 // pred_region
      %s311 = ssub.s32 128, 128
      %312 = vsyncadd [#allocation3], %s311
      %s314 = sshll.u32 [#allocation2], 4
      %s315 = int_to_ptr.vmem [resolvable:$true] %s314
      %317 = dma.vmem_to_hbm [thread:$0]  %s315, 128, %s7, [#allocation3]
    $region33: #{mlp_forward.1} parent=1 // pred_fallthru
      _
    // Predicated region
    $region34: #{mlp_forward.1} parent=1 // pred_check
      _
    $region35: #{mlp_forward.1} parent=1 // pred_check_branch
      %319 = sbr.rel (0) target = $region37
    $region36: #{mlp_forward.1} parent=1 // pred_region
      %320 = dma.done [#allocation3], 128
    $region37: #{mlp_forward.1} parent=1 // pred_fallthru
      _
    %321 = vsyncpa [#allocation3], 1

</llo_original>
